<compile_context>
chip_gen: v7x
topology: tpu7x:2x2x1
jax: 0.10.0
libtpu: 0.0.40
codegen_flags: <defaults>
</compile_context>

<pallas_src>
import jax
import jax.numpy as jnp
from jax.experimental import pallas as pl
from jax.experimental.pallas import tpu as pltpu


def _round_up(x, m):
    return ((x + m - 1) // m) * m


def _treelstm_kernel(hl_ref, hr_ref, cl_ref, cr_ref, w_ref, b_ref,
                     h_ref, c_ref):
    Hp = h_ref.shape[-1]
    f32 = jnp.float32

    # Fused gate pre-activations: [hl | hr] @ W_fused + b_fused, as two
    # accumulated K=Hp MXU dots against the resident weight halves.
    v = (jnp.dot(hl_ref[...], w_ref[:Hp, :], preferred_element_type=f32)
         + jnp.dot(hr_ref[...], w_ref[Hp:, :], preferred_element_type=f32)
         + b_ref[...].astype(f32))

    i = v[:, 0 * Hp:1 * Hp]
    fl = v[:, 1 * Hp:2 * Hp]
    fr = v[:, 2 * Hp:3 * Hp]
    u = v[:, 3 * Hp:4 * Hp]
    o = v[:, 4 * Hp:5 * Hp]

    # 0.5 pre-scale (and +1.0 forget bias) are folded into w_fused/b_fused, so
    # sigmoid(raw_gate [+1]) == 0.5 * tanh(v_gate) + 0.5 here (one EUP op).
    gi = 0.5 * jnp.tanh(i) + 0.5
    gfl = 0.5 * jnp.tanh(fl) + 0.5
    gfr = 0.5 * jnp.tanh(fr) + 0.5
    go = 0.5 * jnp.tanh(o) + 0.5

    c = (cl_ref[...].astype(f32) * gfl
         + cr_ref[...].astype(f32) * gfr
         + jnp.tanh(u) * gi)
    h = go * jnp.tanh(c)

    h_ref[...] = h.astype(h_ref.dtype)
    c_ref[...] = c.astype(c_ref.dtype)


def prepare_params(weight, bias, dtype=None):
    """Hoistable preprocessing of comp_linear params (pay once per tree).

    weight: (5H, 2H)  PyTorch nn.Linear layout (y = x @ W.T + b)
    bias:   (5H,)
    dtype:  optional storage dtype for the fused weight/bias (e.g. bfloat16
            to halve HBM/VMEM traffic; in-kernel gate math stays f32).

    Returns (w_fused, b_fused, H, Hp) where
      w_fused: (2*Hp, 5*Hp) so that [hl_p | hr_p] @ w_fused gives the padded
               gates, with the 0.5 sigmoid pre-scale folded into i/fl/fr/o.
      b_fused: (1, 5*Hp) bias with the same pre-scale and the +1.0
               forget-gate offsets folded in.
    """
    H = weight.shape[1] // 2
    Hp = _round_up(max(H, 1), 128)

    # gate order: i, fl, fr, u, o
    gate_scale = jnp.array([0.5, 0.5, 0.5, 1.0, 0.5], dtype=weight.dtype)
    gate_offset = jnp.array([0.0, 0.5, 0.5, 0.0, 0.0], dtype=weight.dtype)

    def pad_half(w_half):                       # (H, 5H), acts as x @ w_half
        w3 = w_half.reshape(H, 5, H) * gate_scale[None, :, None]
        w3 = jnp.pad(w3, ((0, Hp - H), (0, 0), (0, Hp - H)))
        return w3.reshape(Hp, 5 * Hp)

    wl = pad_half(jnp.transpose(weight[:, :H]))     # left-child half
    wr = pad_half(jnp.transpose(weight[:, H:]))     # right-child half
    w_fused = jnp.concatenate([wl, wr], axis=0)     # (2Hp, 5Hp)

    b2 = bias.reshape(5, H) * gate_scale[:, None] + gate_offset[:, None]
    b_fused = jnp.pad(b2, ((0, 0), (0, Hp - H))).reshape(1, 5 * Hp)

    if dtype is not None:
        w_fused = w_fused.astype(dtype)
        b_fused = b_fused.astype(dtype)
    return w_fused, b_fused, H, Hp


def pad_state(x, Hp):
    """(B, L, H) -> (N8, Hp) padded row-major layout used by the kernel."""
    B, L, H = x.shape
    N = B * L
    N8 = _round_up(N, 8)
    return jnp.pad(x.reshape(N, H), ((0, N8 - N), (0, Hp - H)))


def unpad_state(x2, B, L, H):
    """(N8, Hp) -> (B, L, H); do this only once, after the last tree level."""
    return x2[:B * L, :H].reshape(B, L, H)


def _vmem_capacity_bytes():
    try:
        return int(pltpu.get_tpu_info().vmem_capacity_bytes)
    except Exception:
        return 64 * 1024 * 1024      # conservative fallback (v7x per-TC size)


def _choose_tile_rows(n_rows8, hp, in_dtype, w_dtype, single_buffer_w):
    dt = jnp.dtype(in_dtype).itemsize
    wt = jnp.dtype(w_dtype).itemsize

    # Resident operands: fused weight (single/double buffered) + bias.
    w_bytes = 2 * hp * 5 * hp * wt
    fixed = w_bytes * (1 if single_buffer_w else 2) + 5 * hp * 4

    # Per row: 4 inputs + 2 outputs double-buffered, plus the f32 gate
    # intermediate (2x slack for matmul partials / tanh temporaries).
    per_row = (4 + 2) * 2 * hp * dt + 2 * 5 * hp * 4

    vmem_cap = _vmem_capacity_bytes()
    budget = min(vmem_cap // 2, 48 * 1024 * 1024)
    avail = max(budget - fixed, 8 * per_row)

    step = 16 if dt < 4 else 8          # bf16 packs 16 sublanes per vreg
    tm = (avail // per_row) // step * step
    tm = max(step, min(1024, tm))
    tm = min(tm, n_rows8)

    # Keep both v7x TensorCores busy: at least two row tiles when N permits.
    if tm >= n_rows8 and n_rows8 >= 256:
        tm = min(_round_up((n_rows8 + 1) // 2, step), n_rows8)

    vmem_needed = fixed + tm * per_row + (4 << 20)
    vmem_limit = int(min(vmem_cap, max(vmem_needed, 32 << 20)))
    return tm, vmem_limit


def binary_tree_lstm_layer_padded(left, right, params):
    """Core kernel on padded row-major state.

    left/right: (h, c) tuples, each (N8, Hp) with N8 % 8 == 0, Hp % 128 == 0.
    Returns (h, c) in the same (N8, Hp) layout, so a tree-level loop can keep
    state padded across levels (no per-level pad/slice HBM round trips).
    """
    hl2, cl2 = left
    hr2, cr2 = right
    w_fused, b_fused, H, Hp = params
    N8 = hl2.shape[0]
    dt = hl2.dtype

    w_bytes = w_fused.size * jnp.dtype(w_fused.dtype).itemsize
    single_buffer_w = w_bytes > (2 << 20)   # only worth it once the weight is big
    TM, vmem_limit = _choose_tile_rows(N8, Hp, dt, w_fused.dtype, single_buffer_w)
    n_tiles = pl.cdiv(N8, TM)

    row_spec = pl.BlockSpec((TM, Hp), lambda i: (i, 0))
    if single_buffer_w:
        # Constant index map => a second pipeline buffer is pure VMEM waste.
        w_spec = pl.BlockSpec((2 * Hp, 5 * Hp), lambda i: (0, 0),
                              pipeline_mode=pl.Buffered(1))
        b_spec = pl.BlockSpec((1, 5 * Hp), lambda i: (0, 0),
                              pipeline_mode=pl.Buffered(1))
    else:
        w_spec = pl.BlockSpec((2 * Hp, 5 * Hp), lambda i: (0, 0))
        b_spec = pl.BlockSpec((1, 5 * Hp), lambda i: (0, 0))

    # TODO(synk): for very large H (>= ~1024) on v7x, add a K-tiling grid axis
    # (or store w_fused in bf16) so the resident weight leaves room for large
    # double-buffered row tiles within 64 MiB per-TC VMEM.

    itemsize = jnp.dtype(dt).itemsize
    cost = pl.CostEstimate(
        flops=2 * N8 * (2 * Hp) * (5 * Hp),
        transcendentals=6 * N8 * Hp,
        bytes_accessed=(6 * N8 * Hp * itemsize + w_bytes
                        + b_fused.size * jnp.dtype(b_fused.dtype).itemsize),
    )

    h_out, c_out = pl.pallas_call(
        _treelstm_kernel,
        out_shape=(jax.ShapeDtypeStruct((N8, Hp), dt),
                   jax.ShapeDtypeStruct((N8, Hp), dt)),
        grid_spec=pltpu.PrefetchScalarGridSpec(
            num_scalar_prefetch=0,
            grid=(n_tiles,),
            in_specs=[row_spec, row_spec, row_spec, row_spec, w_spec, b_spec],
            out_specs=[row_spec, row_spec],
        ),
        compiler_params=pltpu.CompilerParams(
            dimension_semantics=("parallel",),
            vmem_limit_bytes=vmem_limit,
        ),
        cost_estimate=cost,
    )(hl2, hr2, cl2, cr2, w_fused, b_fused)
    return h_out, c_out


def binary_tree_lstm_layer(left, right, params):
    """(B, L, H) interface matching the PyTorch module's forward()."""
    hl, cl = left
    hr, cr = right
    _, _, H, Hp = params
    B, L, _ = hl.shape
    h2, c2 = binary_tree_lstm_layer_padded(
        (pad_state(hl, Hp), pad_state(cl, Hp)),
        (pad_state(hr, Hp), pad_state(cr, Hp)),
        params)
    return unpad_state(h2, B, L, H), unpad_state(c2, B, L, H)


def _reference(left, right, weight, bias):
    hl, cl = left
    hr, cr = right
    x = jnp.concatenate([hl, hr], axis=2)
    v = jnp.einsum('blk,ok->blo', x, weight) + bias
    H = hl.shape[-1]
    i, fl, fr, u, o = [v[..., j * H:(j + 1) * H] for j in range(5)]
    c = (cl * jax.nn.sigmoid(fl + 1.0) + cr * jax.nn.sigmoid(fr + 1.0)
         + jnp.tanh(u) * jax.nn.sigmoid(i))
    h = jax.nn.sigmoid(o) * jnp.tanh(c)
    return h, c


if __name__ == "__main__":
    B, L, H = 2, 8, 32
    key = jax.random.PRNGKey(0)
    k_hl, k_cl, k_hr, k_cr, k_w = jax.random.split(key, 5)

    hl = jax.random.normal(k_hl, (B, L, H), dtype=jnp.float32)
    cl = jax.random.normal(k_cl, (B, L, H), dtype=jnp.float32)
    hr = jax.random.normal(k_hr, (B, L, H), dtype=jnp.float32)
    cr = jax.random.normal(k_cr, (B, L, H), dtype=jnp.float32)

    # kaiming_normal_ on (5H, 2H): fan_in = 2H, gain = sqrt(2) -> std = sqrt(2/(2H))
    std = (2.0 / (2 * H)) ** 0.5
    weight = jax.random.normal(k_w, (5 * H, 2 * H), dtype=jnp.float32) * std
    bias = jnp.zeros((5 * H,), dtype=jnp.float32)

    # Hoisted once per tree (weight transpose/pad/fuse + gate-bias folding).
    params = prepare_params(weight, bias)
    Hp = params[3]

    # Level 1: module-compatible (B, L, H) API, verified against reference.
    h1, c1 = binary_tree_lstm_layer((hl, cl), (hr, cr), params)
    h1 = jax.block_until_ready(h1)
    c1 = jax.block_until_ready(c1)
    h1_ref, c1_ref = _reference((hl, cl), (hr, cr), weight, bias)
    assert h1.shape == (B, L, H) and c1.shape == (B, L, H)
    assert jnp.allclose(h1, h1_ref, atol=1e-5, rtol=1e-5)
    assert jnp.allclose(c1, c1_ref, atol=1e-5, rtol=1e-5)

    # Level 2: stay in the padded (N8, Hp) layout across tree levels (no
    # per-level pad/slice HBM round trips); strip padding once at the end.
    hl_p, cl_p = pad_state(hl, Hp), pad_state(cl, Hp)
    hr_p, cr_p = pad_state(hr, Hp), pad_state(cr, Hp)
    h1p, c1p = binary_tree_lstm_layer_padded((hl_p, cl_p), (hr_p, cr_p), params)
    h2p, c2p = binary_tree_lstm_layer_padded((h1p, c1p), (hr_p, cr_p), params)
    h2 = jax.block_until_ready(unpad_state(h2p, B, L, H))
    c2 = unpad_state(c2p, B, L, H)

    h2_ref, c2_ref = _reference((h1_ref, c1_ref), (hr, cr), weight, bias)
    assert jnp.allclose(h2, h2_ref, atol=1e-4, rtol=1e-4)
    assert jnp.allclose(c2, c2_ref, atol=1e-4, rtol=1e-4)

    print("KERNEL_OK")
</pallas_src>

<mosaic_0001>
module attributes {stable_mosaic.version = 11 : i64} {
  func.func @_treelstm_kernel(%arg0: i32, %arg1: memref<16x128xf32, #tpu.memory_space<vmem>>, %arg2: memref<16x128xf32, #tpu.memory_space<vmem>>, %arg3: memref<16x128xf32, #tpu.memory_space<vmem>>, %arg4: memref<16x128xf32, #tpu.memory_space<vmem>>, %arg5: memref<256x640xf32, #tpu.memory_space<vmem>>, %arg6: memref<1x640xf32, #tpu.memory_space<vmem>>, %arg7: memref<16x128xf32, #tpu.memory_space<vmem>>, %arg8: memref<16x128xf32, #tpu.memory_space<vmem>>) attributes {dimension_semantics = [#tpu.dimension_semantics<parallel>], iteration_bounds = array<i64: 1>, scalar_prefetch = 0 : i64, scratch_operands = 0 : i64, tpu.core_type = #tpu.core_type<tc>, window_params = [{transform_indices = @transform_0, window_bounds = array<i64: 16, 128>}, {transform_indices = @transform_1, window_bounds = array<i64: 16, 128>}, {transform_indices = @transform_2, window_bounds = array<i64: 16, 128>}, {transform_indices = @transform_3, window_bounds = array<i64: 16, 128>}, {pipeline_mode = #tpu.pipeline_mode<synchronous>, transform_indices = @transform_4, window_bounds = array<i64: 256, 640>}, {pipeline_mode = #tpu.pipeline_mode<synchronous>, transform_indices = @transform_5, window_bounds = array<i64: 1, 640>}, {transform_indices = @transform_6, window_bounds = array<i64: 16, 128>}, {transform_indices = @transform_7, window_bounds = array<i64: 16, 128>}]} {
    %c0 = arith.constant 0 : index
    %c0_0 = arith.constant 0 : index
    %0 = vector.load %arg1[%c0, %c0_0] : memref<16x128xf32, #tpu.memory_space<vmem>>, vector<16x128xf32>
    %c0_1 = arith.constant 0 : index
    %c0_2 = arith.constant 0 : index
    %1 = vector.load %arg5[%c0_1, %c0_2] : memref<256x640xf32, #tpu.memory_space<vmem>>, vector<128x640xf32>
    %cst = arith.constant dense<0.000000e+00> : vector<16x640xf32>
    %2 = tpu.matmul %0, %1, %cst {dimension_numbers = #tpu.dot_dimension_numbers<[1], [0], [0], [1], [0, 0, 1, 1], [], []>} : vector<16x128xf32>, vector<128x640xf32>, vector<16x640xf32> -> vector<16x640xf32>
    %c0_3 = arith.constant 0 : index
    %c0_4 = arith.constant 0 : index
    %3 = vector.load %arg2[%c0_3, %c0_4] : memref<16x128xf32, #tpu.memory_space<vmem>>, vector<16x128xf32>
    %c128 = arith.constant 128 : index
    %c0_5 = arith.constant 0 : index
    %4 = vector.load %arg5[%c128, %c0_5] : memref<256x640xf32, #tpu.memory_space<vmem>>, vector<128x640xf32>
    %cst_6 = arith.constant dense<0.000000e+00> : vector<16x640xf32>
    %5 = tpu.matmul %3, %4, %cst_6 {dimension_numbers = #tpu.dot_dimension_numbers<[1], [0], [0], [1], [0, 0, 1, 1], [], []>} : vector<16x128xf32>, vector<128x640xf32>, vector<16x640xf32> -> vector<16x640xf32>
    %6 = arith.addf %2, %5 : vector<16x640xf32>
    %c0_7 = arith.constant 0 : index
    %c0_8 = arith.constant 0 : index
    %7 = vector.load %arg6[%c0_7, %c0_8] : memref<1x640xf32, #tpu.memory_space<vmem>>, vector<1x640xf32>
    %8 = vector.broadcast %7 : vector<1x640xf32> to vector<16x640xf32>
    %9 = arith.addf %6, %8 : vector<16x640xf32>
    %10 = vector.extract_strided_slice %9 {offsets = [0, 0], sizes = [16, 128], strides = [1, 1]} : vector<16x640xf32> to vector<16x128xf32>
    %11 = vector.extract_strided_slice %9 {offsets = [0, 128], sizes = [16, 128], strides = [1, 1]} : vector<16x640xf32> to vector<16x128xf32>
    %12 = vector.extract_strided_slice %9 {offsets = [0, 256], sizes = [16, 128], strides = [1, 1]} : vector<16x640xf32> to vector<16x128xf32>
    %13 = vector.extract_strided_slice %9 {offsets = [0, 384], sizes = [16, 128], strides = [1, 1]} : vector<16x640xf32> to vector<16x128xf32>
    %14 = vector.extract_strided_slice %9 {offsets = [0, 512], sizes = [16, 128], strides = [1, 1]} : vector<16x640xf32> to vector<16x128xf32>
    %15 = math.tanh %10 : vector<16x128xf32>
    %cst_9 = arith.constant 5.000000e-01 : f32
    %16 = vector.broadcast %cst_9 : f32 to vector<16x128xf32>
    %17 = arith.mulf %16, %15 : vector<16x128xf32>
    %cst_10 = arith.constant 5.000000e-01 : f32
    %18 = vector.broadcast %cst_10 : f32 to vector<16x128xf32>
    %19 = arith.addf %17, %18 : vector<16x128xf32>
    %20 = math.tanh %11 : vector<16x128xf32>
    %cst_11 = arith.constant 5.000000e-01 : f32
    %21 = vector.broadcast %cst_11 : f32 to vector<16x128xf32>
    %22 = arith.mulf %21, %20 : vector<16x128xf32>
    %cst_12 = arith.constant 5.000000e-01 : f32
    %23 = vector.broadcast %cst_12 : f32 to vector<16x128xf32>
    %24 = arith.addf %22, %23 : vector<16x128xf32>
    %25 = math.tanh %12 : vector<16x128xf32>
    %cst_13 = arith.constant 5.000000e-01 : f32
    %26 = vector.broadcast %cst_13 : f32 to vector<16x128xf32>
    %27 = arith.mulf %26, %25 : vector<16x128xf32>
    %cst_14 = arith.constant 5.000000e-01 : f32
    %28 = vector.broadcast %cst_14 : f32 to vector<16x128xf32>
    %29 = arith.addf %27, %28 : vector<16x128xf32>
    %30 = math.tanh %14 : vector<16x128xf32>
    %cst_15 = arith.constant 5.000000e-01 : f32
    %31 = vector.broadcast %cst_15 : f32 to vector<16x128xf32>
    %32 = arith.mulf %31, %30 : vector<16x128xf32>
    %cst_16 = arith.constant 5.000000e-01 : f32
    %33 = vector.broadcast %cst_16 : f32 to vector<16x128xf32>
    %34 = arith.addf %32, %33 : vector<16x128xf32>
    %c0_17 = arith.constant 0 : index
    %c0_18 = arith.constant 0 : index
    %35 = vector.load %arg3[%c0_17, %c0_18] : memref<16x128xf32, #tpu.memory_space<vmem>>, vector<16x128xf32>
    %36 = arith.mulf %35, %24 : vector<16x128xf32>
    %c0_19 = arith.constant 0 : index
    %c0_20 = arith.constant 0 : index
    %37 = vector.load %arg4[%c0_19, %c0_20] : memref<16x128xf32, #tpu.memory_space<vmem>>, vector<16x128xf32>
    %38 = arith.mulf %37, %29 : vector<16x128xf32>
    %39 = arith.addf %36, %38 : vector<16x128xf32>
    %40 = math.tanh %13 : vector<16x128xf32>
    %41 = arith.mulf %40, %19 : vector<16x128xf32>
    %42 = arith.addf %39, %41 : vector<16x128xf32>
    %43 = math.tanh %42 : vector<16x128xf32>
    %44 = arith.mulf %34, %43 : vector<16x128xf32>
    %c0_21 = arith.constant 0 : index
    %c0_22 = arith.constant 0 : index
    %45 = vector.load %arg7[%c0_21, %c0_22] : memref<16x128xf32, #tpu.memory_space<vmem>>, vector<16x128xf32>
    tpu.vector_store %arg7[%c0_21, %c0_22], %44 {strides = array<i32>} : memref<16x128xf32, #tpu.memory_space<vmem>>, vector<16x128xf32>,
    %c0_23 = arith.constant 0 : index
    %c0_24 = arith.constant 0 : index
    %46 = vector.load %arg8[%c0_23, %c0_24] : memref<16x128xf32, #tpu.memory_space<vmem>>, vector<16x128xf32>
    tpu.vector_store %arg8[%c0_23, %c0_24], %42 {strides = array<i32>} : memref<16x128xf32, #tpu.memory_space<vmem>>, vector<16x128xf32>,
    return
  }
  func.func @transform_0(%arg0: i32) -> (i32, i32) {
    %c0_i32 = arith.constant 0 : i32
    %c0_i32_0 = arith.constant 0 : i32
    return %arg0, %c0_i32 : i32, i32
  }
  func.func @transform_1(%arg0: i32) -> (i32, i32) {
    %c0_i32 = arith.constant 0 : i32
    %c0_i32_0 = arith.constant 0 : i32
    return %arg0, %c0_i32 : i32, i32
  }
  func.func @transform_2(%arg0: i32) -> (i32, i32) {
    %c0_i32 = arith.constant 0 : i32
    %c0_i32_0 = arith.constant 0 : i32
    return %arg0, %c0_i32 : i32, i32
  }
  func.func @transform_3(%arg0: i32) -> (i32, i32) {
    %c0_i32 = arith.constant 0 : i32
    %c0_i32_0 = arith.constant 0 : i32
    return %arg0, %c0_i32 : i32, i32
  }
  func.func @transform_4(%arg0: i32) -> (i32, i32) {
    %c0_i32 = arith.constant 0 : i32
    %c0_i32_0 = arith.constant 0 : i32
    %c0_i32_1 = arith.constant 0 : i32
    return %c0_i32, %c0_i32_0 : i32, i32
  }
  func.func @transform_5(%arg0: i32) -> (i32, i32) {
    %c0_i32 = arith.constant 0 : i32
    %c0_i32_0 = arith.constant 0 : i32
    %c0_i32_1 = arith.constant 0 : i32
    return %c0_i32, %c0_i32_0 : i32, i32
  }
  func.func @transform_6(%arg0: i32) -> (i32, i32) {
    %c0_i32 = arith.constant 0 : i32
    %c0_i32_0 = arith.constant 0 : i32
    return %arg0, %c0_i32 : i32, i32
  }
  func.func @transform_7(%arg0: i32) -> (i32, i32) {
    %c0_i32 = arith.constant 0 : i32
    %c0_i32_0 = arith.constant 0 : i32
    return %arg0, %c0_i32 : i32, i32
  }
}

</mosaic_0001>

<llo_original>
// kernel: tpu_custom_call.1
$region0: #{tpu_custom_call.1}
  #allocation0 [shape = 'u32[]', space=smem, size = 0x4, offset = 0x4, fixed_abs, tag = 'smem constant byte address 0x4 - core index']
  #allocation1 [shape = 'u32[144,128]{1,0:T(1,128)}', space=vmem, size = 0x12000, scoped, tag = 'internal scratch']
  %s0 = inlined_call_operand.hbm [shape: f32[16,128], index: 0, kind: input, shape index: {}]
  %s1 = inlined_call_operand.hbm [shape: f32[16,128], index: 1, kind: input, shape index: {}]
  %s2 = inlined_call_operand.hbm [shape: f32[16,128], index: 2, kind: input, shape index: {}]
  %s3 = inlined_call_operand.hbm [shape: f32[16,128], index: 3, kind: input, shape index: {}]
  %s4 = inlined_call_operand.hbm [shape: f32[256,640], index: 4, kind: input, shape index: {}]
  %s5 = inlined_call_operand.vmem [shape: f32[1,640], index: 5, kind: input, shape index: {}]
  %s6 = inlined_call_operand.hbm [shape: f32[16,128], index: 6, kind: output, shape index: {0}]
  %s7 = inlined_call_operand.hbm [shape: f32[16,128], index: 7, kind: output, shape index: {1}]
  %8 = xla_tuple %s6, %s7
  %s9 = sld [smem:[#allocation0]]
  $region62: #{tpu_custom_call.1} parent=0
    _
  %s11 = ssub.s32 1, %s9
  %s12 = scalar_select 0, %s11, %s9
  $region1: #{tpu_custom_call.1} parent=0
    #allocation2 [shape = 'u8[8192]{0}', space=vmem, size = 0x2000, scoped, tag = 'input window, operand 0, single buffered']
    #allocation3 [shape = 's32[1]{0}', space=sflag, size = 0x4, scoped, tag = 'scoped memory for tpu_custom_call.1']
    #allocation4 [shape = 's32[1]{0}', space=sflag, size = 0x4, scoped, tag = 'scoped memory for tpu_custom_call.1']
    #allocation5 [shape = 'u8[8192]{0}', space=vmem, size = 0x2000, scoped, tag = 'input window, operand 1, single buffered']
    #allocation6 [shape = 's32[1]{0}', space=sflag, size = 0x4, scoped, tag = 'scoped memory for tpu_custom_call.1']
    #allocation7 [shape = 'u8[8192]{0}', space=vmem, size = 0x2000, scoped, tag = 'input window, operand 2, single buffered']
    #allocation8 [shape = 'u8[8192]{0}', space=vmem, size = 0x2000, scoped, tag = 'input window, operand 3, single buffered']
    #allocation9 [shape = 's32[1]{0}', space=sflag, size = 0x4, scoped, tag = 'scoped memory for tpu_custom_call.1']
    #allocation10 [shape = 'u8[655360]{0}', space=vmem, size = 0xa0000, scoped, tag = 'input window, operand 4, single buffered']
    #allocation11 [shape = 'u8[8192]{0}', space=vmem, size = 0x2000, scoped, tag = 'output window, operand 0, single buffered']
    #allocation12 [shape = 'u8[8192]{0}', space=vmem, size = 0x2000, scoped, tag = 'output window, operand 1, single buffered']
    #allocation13 [shape = 's32[1]{0}', space=sflag, size = 0x4, scoped, tag = 'scoped memory for tpu_custom_call.1']
    %13 = vsyncpa [#allocation3], 0
    %14 = vsyncpa [#allocation6], 0
    %15 = vsyncpa [#allocation9], 0
    %16 = vsyncpa [#allocation4], 0
    %17 = vsyncpa [#allocation13], 0
    // Predicated region
    $region2: #{tpu_custom_call.1} parent=1 // pred_check
      _
    $region3: #{tpu_custom_call.1} parent=1 // pred_check_branch
      %19 = sbr.rel (0) target = $region5
    $region4: #{tpu_custom_call.1} parent=1 // pred_region
      %s21 = ssub.s32 256, 256
      %22 = vsyncadd [#allocation3], %s21
      %s23 = sshll.u32 [#allocation2], 4
      %s24 = int_to_ptr.vmem [resolvable:$true] %s23
      %29 = dma.hbm_to_vmem [thread:$0]  %s0, 256, %s24, [#allocation3], 128, 128, 8
    $region5: #{tpu_custom_call.1} parent=1 // pred_fallthru
      _
    // Predicated region
    $region6: #{tpu_custom_call.1} parent=1 // pred_check
      _
    $region7: #{tpu_custom_call.1} parent=1 // pred_check_branch
      %31 = sbr.rel (0) target = $region9
    $region8: #{tpu_custom_call.1} parent=1 // pred_region
      %s33 = ssub.s32 256, 256
      %34 = vsyncadd [#allocation6], %s33
      %s35 = sshll.u32 [#allocation5], 4
      %s36 = int_to_ptr.vmem [resolvable:$true] %s35
      %41 = dma.hbm_to_vmem [thread:$0]  %s1, 256, %s36, [#allocation6], 128, 128, 8
    $region9: #{tpu_custom_call.1} parent=1 // pred_fallthru
      _
    // Predicated region
    $region10: #{tpu_custom_call.1} parent=1 // pred_check
      _
    $region11: #{tpu_custom_call.1} parent=1 // pred_check_branch
      %43 = sbr.rel (0) target = $region13
    $region12: #{tpu_custom_call.1} parent=1 // pred_region
      %s45 = ssub.s32 256, 256
      %46 = vsyncadd [#allocation6], %s45
      %s47 = sshll.u32 [#allocation7], 4
      %s48 = int_to_ptr.vmem [resolvable:$true] %s47
      %53 = dma.hbm_to_vmem [thread:$0]  %s2, 256, %s48, [#allocation6], 128, 128, 8
    $region13: #{tpu_custom_call.1} parent=1 // pred_fallthru
      _
    // Predicated region
    $region14: #{tpu_custom_call.1} parent=1 // pred_check
      _
    $region15: #{tpu_custom_call.1} parent=1 // pred_check_branch
      %55 = sbr.rel (0) target = $region17
    $region16: #{tpu_custom_call.1} parent=1 // pred_region
      %s57 = ssub.s32 256, 256
      %58 = vsyncadd [#allocation9], %s57
      %s59 = sshll.u32 [#allocation8], 4
      %s60 = int_to_ptr.vmem [resolvable:$true] %s59
      %65 = dma.hbm_to_vmem [thread:$0]  %s3, 256, %s60, [#allocation9], 128, 128, 8
    $region17: #{tpu_custom_call.1} parent=1 // pred_fallthru
      _
    // Predicated region
    $region18: #{tpu_custom_call.1} parent=1 // pred_check
      _
    $region19: #{tpu_custom_call.1} parent=1 // pred_check_branch
      %67 = sbr.rel (0) target = $region21
    $region20: #{tpu_custom_call.1} parent=1 // pred_region
      %s69 = ssub.s32 20480, 20480
      %70 = vsyncadd [#allocation9], %s69
      %s71 = sshll.u32 [#allocation10], 4
      %s72 = int_to_ptr.vmem [resolvable:$true] %s71
      %77 = dma.hbm_to_vmem [thread:$0]  %s4, 20480, %s72, [#allocation9], 640, 640, 40
    $region21: #{tpu_custom_call.1} parent=1 // pred_fallthru
      _
    // Predicated region
    $region22: #{tpu_custom_call.1} parent=1 // pred_check
      _
    $region23: #{tpu_custom_call.1} parent=1 // pred_check_branch
      %79 = sbr.rel (0) target = $region25
    $region24: #{tpu_custom_call.1} parent=1 // pred_region
      _
    $region25: #{tpu_custom_call.1} parent=1 // pred_fallthru
      _
    // Predicated region
    $region26: #{tpu_custom_call.1} parent=1 // pred_check
      _
    $region27: #{tpu_custom_call.1} parent=1 // pred_check_branch
      %81 = sbr.rel (0) target = $region29
    $region28: #{tpu_custom_call.1} parent=1 // pred_region
      %82 = dma.done [#allocation3], 256
    $region29: #{tpu_custom_call.1} parent=1 // pred_fallthru
      _
    // Predicated region
    $region30: #{tpu_custom_call.1} parent=1 // pred_check
      _
    $region31: #{tpu_custom_call.1} parent=1 // pred_check_branch
      %84 = sbr.rel (0) target = $region33
    $region32: #{tpu_custom_call.1} parent=1 // pred_region
      %85 = dma.done [#allocation6], 256
    $region33: #{tpu_custom_call.1} parent=1 // pred_fallthru
      _
    // Predicated region
    $region34: #{tpu_custom_call.1} parent=1 // pred_check
      _
    $region35: #{tpu_custom_call.1} parent=1 // pred_check_branch
      %87 = sbr.rel (0) target = $region37
    $region36: #{tpu_custom_call.1} parent=1 // pred_region
      %88 = dma.done [#allocation6], 256
    $region37: #{tpu_custom_call.1} parent=1 // pred_fallthru
      _
    // Predicated region
    $region38: #{tpu_custom_call.1} parent=1 // pred_check
      _
    $region39: #{tpu_custom_call.1} parent=1 // pred_check_branch
      %90 = sbr.rel (0) target = $region41
    $region40: #{tpu_custom_call.1} parent=1 // pred_region
      %91 = dma.done [#allocation9], 256
    $region41: #{tpu_custom_call.1} parent=1 // pred_fallthru
      _
    // Predicated region
    $region42: #{tpu_custom_call.1} parent=1 // pred_check
      _
    $region43: #{tpu_custom_call.1} parent=1 // pred_check_branch
      %93 = sbr.rel (0) target = $region45
    $region44: #{tpu_custom_call.1} parent=1 // pred_region
      %94 = dma.done [#allocation9], 20480
    $region45: #{tpu_custom_call.1} parent=1 // pred_fallthru
      _
    %v95 = vld [vmem:[#allocation2] sm:$0xff]
    %v96 = vld [vmem:[#allocation2 + $0x8] sm:$0xff]
    %v97 = vld [vmem:[#allocation10] sm:$0xff]
    %v98 = vld [vmem:[#allocation10 + $0x8] sm:$0xff]
    %v99 = vld [vmem:[#allocation10 + $0x10] sm:$0xff]
    %v100 = vld [vmem:[#allocation10 + $0x18] sm:$0xff]
    %v101 = vld [vmem:[#allocation10 + $0x20] sm:$0xff]
    %v102 = vld [vmem:[#allocation10 + $0x28] sm:$0xff]
    %v103 = vld [vmem:[#allocation10 + $0x30] sm:$0xff]
    %v104 = vld [vmem:[#allocation10 + $0x38] sm:$0xff]
    %v105 = vld [vmem:[#allocation10 + $0x40] sm:$0xff]
    %v106 = vld [vmem:[#allocation10 + $0x48] sm:$0xff]
    %v107 = vld [vmem:[#allocation10 + $0x50] sm:$0xff]
    %v108 = vld [vmem:[#allocation10 + $0x58] sm:$0xff]
    %v109 = vld [vmem:[#allocation10 + $0x60] sm:$0xff]
    %v110 = vld [vmem:[#allocation10 + $0x68] sm:$0xff]
    %v111 = vld [vmem:[#allocation10 + $0x70] sm:$0xff]
    %v112 = vld [vmem:[#allocation10 + $0x78] sm:$0xff]
    %v113 = vld [vmem:[#allocation10 + $0x80] sm:$0xff]
    %v114 = vld [vmem:[#allocation10 + $0x88] sm:$0xff]
    %v115 = vld [vmem:[#allocation10 + $0x90] sm:$0xff]
    %v116 = vld [vmem:[#allocation10 + $0x98] sm:$0xff]
    %v117 = vld [vmem:[#allocation10 + $0xa0] sm:$0xff]
    %v118 = vld [vmem:[#allocation10 + $0xa8] sm:$0xff]
    %v119 = vld [vmem:[#allocation10 + $0xb0] sm:$0xff]
    %v120 = vld [vmem:[#allocation10 + $0xb8] sm:$0xff]
    %v121 = vld [vmem:[#allocation10 + $0xc0] sm:$0xff]
    %v122 = vld [vmem:[#allocation10 + $0xc8] sm:$0xff]
    %v123 = vld [vmem:[#allocation10 + $0xd0] sm:$0xff]
    %v124 = vld [vmem:[#allocation10 + $0xd8] sm:$0xff]
    %v125 = vld [vmem:[#allocation10 + $0xe0] sm:$0xff]
    %v126 = vld [vmem:[#allocation10 + $0xe8] sm:$0xff]
    %v127 = vld [vmem:[#allocation10 + $0xf0] sm:$0xff]
    %v128 = vld [vmem:[#allocation10 + $0xf8] sm:$0xff]
    %v129 = vld [vmem:[#allocation10 + $0x100] sm:$0xff]
    %v130 = vld [vmem:[#allocation10 + $0x108] sm:$0xff]
    %v131 = vld [vmem:[#allocation10 + $0x110] sm:$0xff]
    %v132 = vld [vmem:[#allocation10 + $0x118] sm:$0xff]
    %v133 = vld [vmem:[#allocation10 + $0x120] sm:$0xff]
    %v134 = vld [vmem:[#allocation10 + $0x128] sm:$0xff]
    %v135 = vld [vmem:[#allocation10 + $0x130] sm:$0xff]
    %v136 = vld [vmem:[#allocation10 + $0x138] sm:$0xff]
    %v137 = vld [vmem:[#allocation10 + $0x140] sm:$0xff]
    %v138 = vld [vmem:[#allocation10 + $0x148] sm:$0xff]
    %v139 = vld [vmem:[#allocation10 + $0x150] sm:$0xff]
    %v140 = vld [vmem:[#allocation10 + $0x158] sm:$0xff]
    %v141 = vld [vmem:[#allocation10 + $0x160] sm:$0xff]
    %v142 = vld [vmem:[#allocation10 + $0x168] sm:$0xff]
    %v143 = vld [vmem:[#allocation10 + $0x170] sm:$0xff]
    %v144 = vld [vmem:[#allocation10 + $0x178] sm:$0xff]
    %v145 = vld [vmem:[#allocation10 + $0x180] sm:$0xff]
    %v146 = vld [vmem:[#allocation10 + $0x188] sm:$0xff]
    %v147 = vld [vmem:[#allocation10 + $0x190] sm:$0xff]
    %v148 = vld [vmem:[#allocation10 + $0x198] sm:$0xff]
    %v149 = vld [vmem:[#allocation10 + $0x1a0] sm:$0xff]
    %v150 = vld [vmem:[#allocation10 + $0x1a8] sm:$0xff]
    %v151 = vld [vmem:[#allocation10 + $0x1b0] sm:$0xff]
    %v152 = vld [vmem:[#allocation10 + $0x1b8] sm:$0xff]
    %v153 = vld [vmem:[#allocation10 + $0x1c0] sm:$0xff]
    %v154 = vld [vmem:[#allocation10 + $0x1c8] sm:$0xff]
    %v155 = vld [vmem:[#allocation10 + $0x1d0] sm:$0xff]
    %v156 = vld [vmem:[#allocation10 + $0x1d8] sm:$0xff]
    %v157 = vld [vmem:[#allocation10 + $0x1e0] sm:$0xff]
    %v158 = vld [vmem:[#allocation10 + $0x1e8] sm:$0xff]
    %v159 = vld [vmem:[#allocation10 + $0x1f0] sm:$0xff]
    %v160 = vld [vmem:[#allocation10 + $0x1f8] sm:$0xff]
    %v161 = vld [vmem:[#allocation10 + $0x200] sm:$0xff]
    %v162 = vld [vmem:[#allocation10 + $0x208] sm:$0xff]
    %v163 = vld [vmem:[#allocation10 + $0x210] sm:$0xff]
    %v164 = vld [vmem:[#allocation10 + $0x218] sm:$0xff]
    %v165 = vld [vmem:[#allocation10 + $0x220] sm:$0xff]
    %v166 = vld [vmem:[#allocation10 + $0x228] sm:$0xff]
    %v167 = vld [vmem:[#allocation10 + $0x230] sm:$0xff]
    %v168 = vld [vmem:[#allocation10 + $0x238] sm:$0xff]
    %v169 = vld [vmem:[#allocation10 + $0x240] sm:$0xff]
    %v170 = vld [vmem:[#allocation10 + $0x248] sm:$0xff]
    %v171 = vld [vmem:[#allocation10 + $0x250] sm:$0xff]
    %v172 = vld [vmem:[#allocation10 + $0x258] sm:$0xff]
    %v173 = vld [vmem:[#allocation10 + $0x260] sm:$0xff]
    %v174 = vld [vmem:[#allocation10 + $0x268] sm:$0xff]
    %v175 = vld [vmem:[#allocation10 + $0x270] sm:$0xff]
    %v176 = vld [vmem:[#allocation10 + $0x278] sm:$0xff]
    %v177 = vld [vmem:[#allocation5] sm:$0xff]
    %v178 = vld [vmem:[#allocation5 + $0x8] sm:$0xff]
    %v179 = vld [vmem:[#allocation10 + $0x280] sm:$0xff]
    %v180 = vld [vmem:[#allocation10 + $0x288] sm:$0xff]
    %v181 = vld [vmem:[#allocation10 + $0x290] sm:$0xff]
    %v182 = vld [vmem:[#allocation10 + $0x298] sm:$0xff]
    %v183 = vld [vmem:[#allocation10 + $0x2a0] sm:$0xff]
    %v184 = vld [vmem:[#allocation10 + $0x2a8] sm:$0xff]
    %v185 = vld [vmem:[#allocation10 + $0x2b0] sm:$0xff]
    %v186 = vld [vmem:[#allocation10 + $0x2b8] sm:$0xff]
    %v187 = vld [vmem:[#allocation10 + $0x2c0] sm:$0xff]
    %v188 = vld [vmem:[#allocation10 + $0x2c8] sm:$0xff]
    %v189 = vld [vmem:[#allocation10 + $0x2d0] sm:$0xff]
    %v190 = vld [vmem:[#allocation10 + $0x2d8] sm:$0xff]
    %v191 = vld [vmem:[#allocation10 + $0x2e0] sm:$0xff]
    %v192 = vld [vmem:[#allocation10 + $0x2e8] sm:$0xff]
    %v193 = vld [vmem:[#allocation10 + $0x2f0] sm:$0xff]
    %v194 = vld [vmem:[#allocation10 + $0x2f8] sm:$0xff]
    %v195 = vld [vmem:[#allocation10 + $0x300] sm:$0xff]
    %v196 = vld [vmem:[#allocation10 + $0x308] sm:$0xff]
    %v197 = vld [vmem:[#allocation10 + $0x310] sm:$0xff]
    %v198 = vld [vmem:[#allocation10 + $0x318] sm:$0xff]
    %v199 = vld [vmem:[#allocation10 + $0x320] sm:$0xff]
    %v200 = vld [vmem:[#allocation10 + $0x328] sm:$0xff]
    %v201 = vld [vmem:[#allocation10 + $0x330] sm:$0xff]
    %v202 = vld [vmem:[#allocation10 + $0x338] sm:$0xff]
    %v203 = vld [vmem:[#allocation10 + $0x340] sm:$0xff]
    %v204 = vld [vmem:[#allocation10 + $0x348] sm:$0xff]
    %v205 = vld [vmem:[#allocation10 + $0x350] sm:$0xff]
    %v206 = vld [vmem:[#allocation10 + $0x358] sm:$0xff]
    %v207 = vld [vmem:[#allocation10 + $0x360] sm:$0xff]
    %v208 = vld [vmem:[#allocation10 + $0x368] sm:$0xff]
    %v209 = vld [vmem:[#allocation10 + $0x370] sm:$0xff]
    %v210 = vld [vmem:[#allocation10 + $0x378] sm:$0xff]
    %v211 = vld [vmem:[#allocation10 + $0x380] sm:$0xff]
    %v212 = vld [vmem:[#allocation10 + $0x388] sm:$0xff]
    %v213 = vld [vmem:[#allocation10 + $0x390] sm:$0xff]
    %v214 = vld [vmem:[#allocation10 + $0x398] sm:$0xff]
    %v215 = vld [vmem:[#allocation10 + $0x3a0] sm:$0xff]
    %v216 = vld [vmem:[#allocation10 + $0x3a8] sm:$0xff]
    %v217 = vld [vmem:[#allocation10 + $0x3b0] sm:$0xff]
    %v218 = vld [vmem:[#allocation10 + $0x3b8] sm:$0xff]
    %v219 = vld [vmem:[#allocation10 + $0x3c0] sm:$0xff]
    %v220 = vld [vmem:[#allocation10 + $0x3c8] sm:$0xff]
    %v221 = vld [vmem:[#allocation10 + $0x3d0] sm:$0xff]
    %v222 = vld [vmem:[#allocation10 + $0x3d8] sm:$0xff]
    %v223 = vld [vmem:[#allocation10 + $0x3e0] sm:$0xff]
    %v224 = vld [vmem:[#allocation10 + $0x3e8] sm:$0xff]
    %v225 = vld [vmem:[#allocation10 + $0x3f0] sm:$0xff]
    %v226 = vld [vmem:[#allocation10 + $0x3f8] sm:$0xff]
    %v227 = vld [vmem:[#allocation10 + $0x400] sm:$0xff]
    %v228 = vld [vmem:[#allocation10 + $0x408] sm:$0xff]
    %v229 = vld [vmem:[#allocation10 + $0x410] sm:$0xff]
    %v230 = vld [vmem:[#allocation10 + $0x418] sm:$0xff]
    %v231 = vld [vmem:[#allocation10 + $0x420] sm:$0xff]
    %v232 = vld [vmem:[#allocation10 + $0x428] sm:$0xff]
    %v233 = vld [vmem:[#allocation10 + $0x430] sm:$0xff]
    %v234 = vld [vmem:[#allocation10 + $0x438] sm:$0xff]
    %v235 = vld [vmem:[#allocation10 + $0x440] sm:$0xff]
    %v236 = vld [vmem:[#allocation10 + $0x448] sm:$0xff]
    %v237 = vld [vmem:[#allocation10 + $0x450] sm:$0xff]
    %v238 = vld [vmem:[#allocation10 + $0x458] sm:$0xff]
    %v239 = vld [vmem:[#allocation10 + $0x460] sm:$0xff]
    %v240 = vld [vmem:[#allocation10 + $0x468] sm:$0xff]
    %v241 = vld [vmem:[#allocation10 + $0x470] sm:$0xff]
    %v242 = vld [vmem:[#allocation10 + $0x478] sm:$0xff]
    %v243 = vld [vmem:[#allocation10 + $0x480] sm:$0xff]
    %v244 = vld [vmem:[#allocation10 + $0x488] sm:$0xff]
    %v245 = vld [vmem:[#allocation10 + $0x490] sm:$0xff]
    %v246 = vld [vmem:[#allocation10 + $0x498] sm:$0xff]
    %v247 = vld [vmem:[#allocation10 + $0x4a0] sm:$0xff]
    %v248 = vld [vmem:[#allocation10 + $0x4a8] sm:$0xff]
    %v249 = vld [vmem:[#allocation10 + $0x4b0] sm:$0xff]
    %v250 = vld [vmem:[#allocation10 + $0x4b8] sm:$0xff]
    %v251 = vld [vmem:[#allocation10 + $0x4c0] sm:$0xff]
    %v252 = vld [vmem:[#allocation10 + $0x4c8] sm:$0xff]
    %v253 = vld [vmem:[#allocation10 + $0x4d0] sm:$0xff]
    %v254 = vld [vmem:[#allocation10 + $0x4d8] sm:$0xff]
    %v255 = vld [vmem:[#allocation10 + $0x4e0] sm:$0xff]
    %v256 = vld [vmem:[#allocation10 + $0x4e8] sm:$0xff]
    %v257 = vld [vmem:[#allocation10 + $0x4f0] sm:$0xff]
    %v258 = vld [vmem:[#allocation10 + $0x4f8] sm:$0xff]
    %259 = vmatprep.subr.mxu0 %v180
    %260 = vmatpush1.msra.mxu0 %v179
    %261 = vmatprep.subr.mxu0 %v185
    %262 = vmatpush1.msra.mxu0 %v184
    %263 = vmatprep.subr.mxu0 %v190
    %264 = vmatpush1.msra.mxu0 %v189
    %265 = vmatprep.subr.mxu0 %v195
    %266 = vmatpush1.msra.mxu0 %v194
    %267 = vmatprep.subr.mxu0 %v200
    %268 = vmatpush1.msra.mxu0 %v199
    %269 = vmatprep.subr.mxu0 %v205
    %270 = vmatpush1.msra.mxu0 %v204
    %271 = vmatprep.subr.mxu0 %v210
    %272 = vmatpush1.msra.mxu0 %v209
    %273 = vmatprep.subr.mxu0 %v215
    %274 = vmatpush1.msra.mxu0 %v214
    %275 = vmatprep.subr.mxu0 %v220
    %276 = vmatpush1.msra.mxu0 %v219
    %277 = vmatprep.subr.mxu0 %v225
    %278 = vmatpush1.msra.mxu0 %v224
    %279 = vmatprep.subr.mxu0 %v230
    %280 = vmatpush1.msra.mxu0 %v229
    %281 = vmatprep.subr.mxu0 %v235
    %282 = vmatpush1.msra.mxu0 %v234
    %283 = vmatprep.subr.mxu0 %v240
    %284 = vmatpush1.msra.mxu0 %v239
    %285 = vmatprep.subr.mxu0 %v245
    %286 = vmatpush1.msra.mxu0 %v244
    %287 = vmatprep.subr.mxu0 %v250
    %288 = vmatpush1.msra.mxu0 %v249
    %289 = vmatprep.subr.mxu0 %v255
    %290 = vmatpush1.msra.mxu0 %v254
    %291 = vmatprep.subr.mxu0 0.0
    %292 = vmatpush1.msra.mxu0 0.0
    %293 = vmatprep.subr.mxu0 0.0
    %294 = vmatpush1.msra.mxu0 0.0
    %295 = vmatprep.subr.mxu0 0.0
    %296 = vmatpush1.msra.mxu0 0.0
    %297 = vmatprep.subr.mxu0 0.0
    %298 = vmatpush1.msra.mxu0 0.0
    %299 = vmatprep.subr.mxu0 0.0
    %300 = vmatpush1.msra.mxu0 0.0
    %301 = vmatprep.subr.mxu0 0.0
    %302 = vmatpush1.msra.mxu0 0.0
    %303 = vmatprep.subr.mxu0 0.0
    %304 = vmatpush1.msra.mxu0 0.0
    %305 = vmatprep.subr.mxu0 0.0
    %306 = vmatpush1.msra.mxu0 0.0
    %307 = vmatprep.subr.mxu0 0.0
    %308 = vmatpush1.msra.mxu0 0.0
    %309 = vmatprep.subr.mxu0 0.0
    %310 = vmatpush1.msra.mxu0 0.0
    %311 = vmatprep.subr.mxu0 0.0
    %312 = vmatpush1.msra.mxu0 0.0
    %313 = vmatprep.subr.mxu0 0.0
    %314 = vmatpush1.msra.mxu0 0.0
    %315 = vmatprep.subr.mxu0 0.0
    %316 = vmatpush1.msra.mxu0 0.0
    %317 = vmatprep.subr.mxu0 0.0
    %318 = vmatpush1.msra.mxu0 0.0
    %319 = vmatprep.subr.mxu0 0.0
    %320 = vmatpush1.msra.mxu0 0.0
    %321 = vmatprep.subr.mxu0 0.0
    %322 = vmatpush1.msra.mxu0 0.0
    %323 = vmatprep.mubr.f32.mxu0 0.0
    %324 = vmatmul.mubr.f32.gmra.mrb[0].mxu0 %v177
    %v325 = vpop.f32.mrb[0].mxu0
    %v326 = vadd.f32 0.0, %v325
    %v327 = vpop.f32.mrb[0].mxu0
    %v328 = vadd.f32 0.0, %v327
    %329 = vmatprep.mubr.f32.mxu0 0.0
    %330 = vmatmul.mubr.f32.gmra.mrb[0].mxu0 %v178
    %v331 = vpop.f32.mrb[0].mxu0
    %v332 = vadd.f32 0.0, %v331
    %v333 = vpop.f32.mrb[0].mxu0
    %v334 = vadd.f32 0.0, %v333
    %335 = vdwg.mxu0
    %336 = vmatprep.subr.mxu0 %v182
    %337 = vmatpush1.msra.mxu0 %v181
    %338 = vmatprep.subr.mxu0 %v187
    %339 = vmatpush1.msra.mxu0 %v186
    %340 = vmatprep.subr.mxu0 %v192
    %341 = vmatpush1.msra.mxu0 %v191
    %342 = vmatprep.subr.mxu0 %v197
    %343 = vmatpush1.msra.mxu0 %v196
    %344 = vmatprep.subr.mxu0 %v202
    %345 = vmatpush1.msra.mxu0 %v201
    %346 = vmatprep.subr.mxu0 %v207
    %347 = vmatpush1.msra.mxu0 %v206
    %348 = vmatprep.subr.mxu0 %v212
    %349 = vmatpush1.msra.mxu0 %v211
    %350 = vmatprep.subr.mxu0 %v217
    %351 = vmatpush1.msra.mxu0 %v216
    %352 = vmatprep.subr.mxu0 %v222
    %353 = vmatpush1.msra.mxu0 %v221
    %354 = vmatprep.subr.mxu0 %v227
    %355 = vmatpush1.msra.mxu0 %v226
    %356 = vmatprep.subr.mxu0 %v232
    %357 = vmatpush1.msra.mxu0 %v231
    %358 = vmatprep.subr.mxu0 %v237
    %359 = vmatpush1.msra.mxu0 %v236
    %360 = vmatprep.subr.mxu0 %v242
    %361 = vmatpush1.msra.mxu0 %v241
    %362 = vmatprep.subr.mxu0 %v247
    %363 = vmatpush1.msra.mxu0 %v246
    %364 = vmatprep.subr.mxu0 %v252
    %365 = vmatpush1.msra.mxu0 %v251
    %366 = vmatprep.subr.mxu0 %v257
    %367 = vmatpush1.msra.mxu0 %v256
    %368 = vmatprep.subr.mxu0 0.0
    %369 = vmatpush1.msra.mxu0 0.0
    %370 = vmatprep.subr.mxu0 0.0
    %371 = vmatpush1.msra.mxu0 0.0
    %372 = vmatprep.subr.mxu0 0.0
    %373 = vmatpush1.msra.mxu0 0.0
    %374 = vmatprep.subr.mxu0 0.0
    %375 = vmatpush1.msra.mxu0 0.0
    %376 = vmatprep.subr.mxu0 0.0
    %377 = vmatpush1.msra.mxu0 0.0
    %378 = vmatprep.subr.mxu0 0.0
    %379 = vmatpush1.msra.mxu0 0.0
    %380 = vmatprep.subr.mxu0 0.0
    %381 = vmatpush1.msra.mxu0 0.0
    %382 = vmatprep.subr.mxu0 0.0
    %383 = vmatpush1.msra.mxu0 0.0
    %384 = vmatprep.subr.mxu0 0.0
    %385 = vmatpush1.msra.mxu0 0.0
    %386 = vmatprep.subr.mxu0 0.0
    %387 = vmatpush1.msra.mxu0 0.0
    %388 = vmatprep.subr.mxu0 0.0
    %389 = vmatpush1.msra.mxu0 0.0
    %390 = vmatprep.subr.mxu0 0.0
    %391 = vmatpush1.msra.mxu0 0.0
    %392 = vmatprep.subr.mxu0 0.0
    %393 = vmatpush1.msra.mxu0 0.0
    %394 = vmatprep.subr.mxu0 0.0
    %395 = vmatpush1.msra.mxu0 0.0
    %396 = vmatprep.subr.mxu0 0.0
    %397 = vmatpush1.msra.mxu0 0.0
    %398 = vmatprep.subr.mxu0 0.0
    %399 = vmatpush1.msra.mxu0 0.0
    %400 = vmatprep.mubr.f32.mxu0 0.0
    %401 = vmatmul.mubr.f32.gmra.mrb[0].mxu0 %v177
    %v402 = vpop.f32.mrb[0].mxu0
    %v403 = vadd.f32 0.0, %v402
    %v404 = vpop.f32.mrb[0].mxu0
    %v405 = vadd.f32 0.0, %v404
    %406 = vmatprep.mubr.f32.mxu0 0.0
    %407 = vmatmul.mubr.f32.gmra.mrb[0].mxu0 %v178
    %v408 = vpop.f32.mrb[0].mxu0
    %v409 = vadd.f32 0.0, %v408
    %v410 = vpop.f32.mrb[0].mxu0
    %v411 = vadd.f32 0.0, %v410
    %412 = vdwg.mxu0
    %413 = vmatprep.subr.mxu0 0.0
    %414 = vmatpush1.msra.mxu0 %v183
    %415 = vmatprep.subr.mxu0 0.0
    %416 = vmatpush1.msra.mxu0 %v188
    %417 = vmatprep.subr.mxu0 0.0
    %418 = vmatpush1.msra.mxu0 %v193
    %419 = vmatprep.subr.mxu0 0.0
    %420 = vmatpush1.msra.mxu0 %v198
    %421 = vmatprep.subr.mxu0 0.0
    %422 = vmatpush1.msra.mxu0 %v203
    %423 = vmatprep.subr.mxu0 0.0
    %424 = vmatpush1.msra.mxu0 %v208
    %425 = vmatprep.subr.mxu0 0.0
    %426 = vmatpush1.msra.mxu0 %v213
    %427 = vmatprep.subr.mxu0 0.0
    %428 = vmatpush1.msra.mxu0 %v218
    %429 = vmatprep.subr.mxu0 0.0
    %430 = vmatpush1.msra.mxu0 %v223
    %431 = vmatprep.subr.mxu0 0.0
    %432 = vmatpush1.msra.mxu0 %v228
    %433 = vmatprep.subr.mxu0 0.0
    %434 = vmatpush1.msra.mxu0 %v233
    %435 = vmatprep.subr.mxu0 0.0
    %436 = vmatpush1.msra.mxu0 %v238
    %437 = vmatprep.subr.mxu0 0.0
    %438 = vmatpush1.msra.mxu0 %v243
    %439 = vmatprep.subr.mxu0 0.0
    %440 = vmatpush1.msra.mxu0 %v248
    %441 = vmatprep.subr.mxu0 0.0
    %442 = vmatpush1.msra.mxu0 %v253
    %443 = vmatprep.subr.mxu0 0.0
    %444 = vmatpush1.msra.mxu0 %v258
    %445 = vmatprep.subr.mxu0 0.0
    %446 = vmatpush1.msra.mxu0 0.0
    %447 = vmatprep.subr.mxu0 0.0
    %448 = vmatpush1.msra.mxu0 0.0
    %449 = vmatprep.subr.mxu0 0.0
    %450 = vmatpush1.msra.mxu0 0.0
    %451 = vmatprep.subr.mxu0 0.0
    %452 = vmatpush1.msra.mxu0 0.0
    %453 = vmatprep.subr.mxu0 0.0
    %454 = vmatpush1.msra.mxu0 0.0
    %455 = vmatprep.subr.mxu0 0.0
    %456 = vmatpush1.msra.mxu0 0.0
    %457 = vmatprep.subr.mxu0 0.0
    %458 = vmatpush1.msra.mxu0 0.0
    %459 = vmatprep.subr.mxu0 0.0
    %460 = vmatpush1.msra.mxu0 0.0
    %461 = vmatprep.subr.mxu0 0.0
    %462 = vmatpush1.msra.mxu0 0.0
    %463 = vmatprep.subr.mxu0 0.0
    %464 = vmatpush1.msra.mxu0 0.0
    %465 = vmatprep.subr.mxu0 0.0
    %466 = vmatpush1.msra.mxu0 0.0
    %467 = vmatprep.subr.mxu0 0.0
    %468 = vmatpush1.msra.mxu0 0.0
    %469 = vmatprep.subr.mxu0 0.0
    %470 = vmatpush1.msra.mxu0 0.0
    %471 = vmatprep.subr.mxu0 0.0
    %472 = vmatpush1.msra.mxu0 0.0
    %473 = vmatprep.subr.mxu0 0.0
    %474 = vmatpush1.msra.mxu0 0.0
    %475 = vmatprep.subr.mxu0 0.0
    %476 = vmatpush1.msra.mxu0 0.0
    %477 = vmatprep.mubr.f32.mxu0 0.0
    %478 = vmatmul.mubr.f32.gmra.mrb[0].mxu0 %v177
    %v479 = vpop.f32.mrb[0].mxu0
    %v480 = vadd.f32 0.0, %v479
    %v481 = vpop.f32.mrb[0].mxu0
    %482 = vmatprep.mubr.f32.mxu0 0.0
    %483 = vmatmul.mubr.f32.gmra.mrb[0].mxu0 %v178
    %v484 = vpop.f32.mrb[0].mxu0
    %v485 = vadd.f32 0.0, %v484
    %v486 = vpop.f32.mrb[0].mxu0
    %487 = vdwg.mxu0
    %488 = vmatprep.subr.mxu0 %v98
    %489 = vmatpush1.msra.mxu0 %v97
    %490 = vmatprep.subr.mxu0 %v103
    %491 = vmatpush1.msra.mxu0 %v102
    %492 = vmatprep.subr.mxu0 %v108
    %493 = vmatpush1.msra.mxu0 %v107
    %494 = vmatprep.subr.mxu0 %v113
    %495 = vmatpush1.msra.mxu0 %v112
    %496 = vmatprep.subr.mxu0 %v118
    %497 = vmatpush1.msra.mxu0 %v117
    %498 = vmatprep.subr.mxu0 %v123
    %499 = vmatpush1.msra.mxu0 %v122
    %500 = vmatprep.subr.mxu0 %v128
    %501 = vmatpush1.msra.mxu0 %v127
    %502 = vmatprep.subr.mxu0 %v133
    %503 = vmatpush1.msra.mxu0 %v132
    %504 = vmatprep.subr.mxu0 %v138
    %505 = vmatpush1.msra.mxu0 %v137
    %506 = vmatprep.subr.mxu0 %v143
    %507 = vmatpush1.msra.mxu0 %v142
    %508 = vmatprep.subr.mxu0 %v148
    %509 = vmatpush1.msra.mxu0 %v147
    %510 = vmatprep.subr.mxu0 %v153
    %511 = vmatpush1.msra.mxu0 %v152
    %512 = vmatprep.subr.mxu0 %v158
    %513 = vmatpush1.msra.mxu0 %v157
    %514 = vmatprep.subr.mxu0 %v163
    %515 = vmatpush1.msra.mxu0 %v162
    %516 = vmatprep.subr.mxu0 %v168
    %517 = vmatpush1.msra.mxu0 %v167
    %518 = vmatprep.subr.mxu0 %v173
    %519 = vmatpush1.msra.mxu0 %v172
    %520 = vmatprep.subr.mxu0 0.0
    %521 = vmatpush1.msra.mxu0 0.0
    %522 = vmatprep.subr.mxu0 0.0
    %523 = vmatpush1.msra.mxu0 0.0
    %524 = vmatprep.subr.mxu0 0.0
    %525 = vmatpush1.msra.mxu0 0.0
    %526 = vmatprep.subr.mxu0 0.0
    %527 = vmatpush1.msra.mxu0 0.0
    %528 = vmatprep.subr.mxu0 0.0
    %529 = vmatpush1.msra.mxu0 0.0
    %530 = vmatprep.subr.mxu0 0.0
    %531 = vmatpush1.msra.mxu0 0.0
    %532 = vmatprep.subr.mxu0 0.0
    %533 = vmatpush1.msra.mxu0 0.0
    %534 = vmatprep.subr.mxu0 0.0
    %535 = vmatpush1.msra.mxu0 0.0
    %536 = vmatprep.subr.mxu0 0.0
    %537 = vmatpush1.msra.mxu0 0.0
    %538 = vmatprep.subr.mxu0 0.0
    %539 = vmatpush1.msra.mxu0 0.0
    %540 = vmatprep.subr.mxu0 0.0
    %541 = vmatpush1.msra.mxu0 0.0
    %542 = vmatprep.subr.mxu0 0.0
    %543 = vmatpush1.msra.mxu0 0.0
    %544 = vmatprep.subr.mxu0 0.0
    %545 = vmatpush1.msra.mxu0 0.0
    %546 = vmatprep.subr.mxu0 0.0
    %547 = vmatpush1.msra.mxu0 0.0
    %548 = vmatprep.subr.mxu0 0.0
    %549 = vmatpush1.msra.mxu0 0.0
    %550 = vmatprep.subr.mxu0 0.0
    %551 = vmatpush1.msra.mxu0 0.0
    %552 = vmatprep.mubr.f32.mxu0 0.0
    %553 = vmatmul.mubr.f32.gmra.mrb[0].mxu0 %v95
    %v554 = vpop.f32.mrb[0].mxu0
    %v555 = vadd.f32 %v326, %v554
    %v556 = vpop.f32.mrb[0].mxu0
    %v557 = vadd.f32 %v328, %v556
    %558 = vmatprep.mubr.f32.mxu0 0.0
    %559 = vmatmul.mubr.f32.gmra.mrb[0].mxu0 %v96
    %v560 = vpop.f32.mrb[0].mxu0
    %v561 = vadd.f32 %v332, %v560
    %v562 = vpop.f32.mrb[0].mxu0
    %v563 = vadd.f32 %v334, %v562
    %564 = vdwg.mxu0
    %565 = vmatprep.subr.mxu0 %v100
    %566 = vmatpush1.msra.mxu0 %v99
    %567 = vmatprep.subr.mxu0 %v105
    %568 = vmatpush1.msra.mxu0 %v104
    %569 = vmatprep.subr.mxu0 %v110
    %570 = vmatpush1.msra.mxu0 %v109
    %571 = vmatprep.subr.mxu0 %v115
    %572 = vmatpush1.msra.mxu0 %v114
    %573 = vmatprep.subr.mxu0 %v120
    %574 = vmatpush1.msra.mxu0 %v119
    %575 = vmatprep.subr.mxu0 %v125
    %576 = vmatpush1.msra.mxu0 %v124
    %577 = vmatprep.subr.mxu0 %v130
    %578 = vmatpush1.msra.mxu0 %v129
    %579 = vmatprep.subr.mxu0 %v135
    %580 = vmatpush1.msra.mxu0 %v134
    %581 = vmatprep.subr.mxu0 %v140
    %582 = vmatpush1.msra.mxu0 %v139
    %583 = vmatprep.subr.mxu0 %v145
    %584 = vmatpush1.msra.mxu0 %v144
    %585 = vmatprep.subr.mxu0 %v150
    %586 = vmatpush1.msra.mxu0 %v149
    %587 = vmatprep.subr.mxu0 %v155
    %588 = vmatpush1.msra.mxu0 %v154
    %589 = vmatprep.subr.mxu0 %v160
    %590 = vmatpush1.msra.mxu0 %v159
    %591 = vmatprep.subr.mxu0 %v165
    %592 = vmatpush1.msra.mxu0 %v164
    %593 = vmatprep.subr.mxu0 %v170
    %594 = vmatpush1.msra.mxu0 %v169
    %595 = vmatprep.subr.mxu0 %v175
    %596 = vmatpush1.msra.mxu0 %v174
    %597 = vmatprep.subr.mxu0 0.0
    %598 = vmatpush1.msra.mxu0 0.0
    %599 = vmatprep.subr.mxu0 0.0
    %600 = vmatpush1.msra.mxu0 0.0
    %601 = vmatprep.subr.mxu0 0.0
    %602 = vmatpush1.msra.mxu0 0.0
    %603 = vmatprep.subr.mxu0 0.0
    %604 = vmatpush1.msra.mxu0 0.0
    %605 = vmatprep.subr.mxu0 0.0
    %606 = vmatpush1.msra.mxu0 0.0
    %607 = vmatprep.subr.mxu0 0.0
    %608 = vmatpush1.msra.mxu0 0.0
    %609 = vmatprep.subr.mxu0 0.0
    %610 = vmatpush1.msra.mxu0 0.0
    %611 = vmatprep.subr.mxu0 0.0
    %612 = vmatpush1.msra.mxu0 0.0
    %613 = vmatprep.subr.mxu0 0.0
    %614 = vmatpush1.msra.mxu0 0.0
    %615 = vmatprep.subr.mxu0 0.0
    %616 = vmatpush1.msra.mxu0 0.0
    %617 = vmatprep.subr.mxu0 0.0
    %618 = vmatpush1.msra.mxu0 0.0
    %619 = vmatprep.subr.mxu0 0.0
    %620 = vmatpush1.msra.mxu0 0.0
    %621 = vmatprep.subr.mxu0 0.0
    %622 = vmatpush1.msra.mxu0 0.0
    %623 = vmatprep.subr.mxu0 0.0
    %624 = vmatpush1.msra.mxu0 0.0
    %625 = vmatprep.subr.mxu0 0.0
    %626 = vmatpush1.msra.mxu0 0.0
    %627 = vmatprep.subr.mxu0 0.0
    %628 = vmatpush1.msra.mxu0 0.0
    %629 = vmatprep.mubr.f32.mxu0 0.0
    %630 = vmatmul.mubr.f32.gmra.mrb[0].mxu0 %v95
    %v631 = vpop.f32.mrb[0].mxu0
    %v632 = vadd.f32 %v403, %v631
    %v633 = vpop.f32.mrb[0].mxu0
    %v634 = vadd.f32 %v405, %v633
    %635 = vmatprep.mubr.f32.mxu0 0.0
    %636 = vmatmul.mubr.f32.gmra.mrb[0].mxu0 %v96
    %v637 = vpop.f32.mrb[0].mxu0
    %v638 = vadd.f32 %v409, %v637
    %v639 = vpop.f32.mrb[0].mxu0
    %v640 = vadd.f32 %v411, %v639
    %641 = vdwg.mxu0
    %642 = vmatprep.subr.mxu0 0.0
    %643 = vmatpush1.msra.mxu0 %v101
    %644 = vmatprep.subr.mxu0 0.0
    %645 = vmatpush1.msra.mxu0 %v106
    %646 = vmatprep.subr.mxu0 0.0
    %647 = vmatpush1.msra.mxu0 %v111
    %648 = vmatprep.subr.mxu0 0.0
    %649 = vmatpush1.msra.mxu0 %v116
    %650 = vmatprep.subr.mxu0 0.0
    %651 = vmatpush1.msra.mxu0 %v121
    %652 = vmatprep.subr.mxu0 0.0
    %653 = vmatpush1.msra.mxu0 %v126
    %654 = vmatprep.subr.mxu0 0.0
    %655 = vmatpush1.msra.mxu0 %v131
    %656 = vmatprep.subr.mxu0 0.0
    %657 = vmatpush1.msra.mxu0 %v136
    %658 = vmatprep.subr.mxu0 0.0
    %659 = vmatpush1.msra.mxu0 %v141
    %660 = vmatprep.subr.mxu0 0.0
    %661 = vmatpush1.msra.mxu0 %v146
    %662 = vmatprep.subr.mxu0 0.0
    %663 = vmatpush1.msra.mxu0 %v151
    %664 = vmatprep.subr.mxu0 0.0
    %665 = vmatpush1.msra.mxu0 %v156
    %666 = vmatprep.subr.mxu0 0.0
    %667 = vmatpush1.msra.mxu0 %v161
    %668 = vmatprep.subr.mxu0 0.0
    %669 = vmatpush1.msra.mxu0 %v166
    %670 = vmatprep.subr.mxu0 0.0
    %671 = vmatpush1.msra.mxu0 %v171
    %672 = vmatprep.subr.mxu0 0.0
    %673 = vmatpush1.msra.mxu0 %v176
    %674 = vmatprep.subr.mxu0 0.0
    %675 = vmatpush1.msra.mxu0 0.0
    %676 = vmatprep.subr.mxu0 0.0
    %677 = vmatpush1.msra.mxu0 0.0
    %678 = vmatprep.subr.mxu0 0.0
    %679 = vmatpush1.msra.mxu0 0.0
    %680 = vmatprep.subr.mxu0 0.0
    %681 = vmatpush1.msra.mxu0 0.0
    %682 = vmatprep.subr.mxu0 0.0
    %683 = vmatpush1.msra.mxu0 0.0
    %684 = vmatprep.subr.mxu0 0.0
    %685 = vmatpush1.msra.mxu0 0.0
    %686 = vmatprep.subr.mxu0 0.0
    %687 = vmatpush1.msra.mxu0 0.0
    %688 = vmatprep.subr.mxu0 0.0
    %689 = vmatpush1.msra.mxu0 0.0
    %690 = vmatprep.subr.mxu0 0.0
    %691 = vmatpush1.msra.mxu0 0.0
    %692 = vmatprep.subr.mxu0 0.0
    %693 = vmatpush1.msra.mxu0 0.0
    %694 = vmatprep.subr.mxu0 0.0
    %695 = vmatpush1.msra.mxu0 0.0
    %696 = vmatprep.subr.mxu0 0.0
    %697 = vmatpush1.msra.mxu0 0.0
    %698 = vmatprep.subr.mxu0 0.0
    %699 = vmatpush1.msra.mxu0 0.0
    %700 = vmatprep.subr.mxu0 0.0
    %701 = vmatpush1.msra.mxu0 0.0
    %702 = vmatprep.subr.mxu0 0.0
    %703 = vmatpush1.msra.mxu0 0.0
    %704 = vmatprep.subr.mxu0 0.0
    %705 = vmatpush1.msra.mxu0 0.0
    %706 = vmatprep.mubr.f32.mxu0 0.0
    %707 = vmatmul.mubr.f32.gmra.mrb[0].mxu0 %v95
    %v708 = vpop.f32.mrb[0].mxu0
    %v709 = vadd.f32 %v480, %v708
    %v710 = vpop.f32.mrb[0].mxu0
    %711 = vmatprep.mubr.f32.mxu0 0.0
    %712 = vmatmul.mubr.f32.gmra.mrb[0].mxu0 %v96
    %v713 = vpop.f32.mrb[0].mxu0
    %v714 = vadd.f32 %v485, %v713
    %v715 = vpop.f32.mrb[0].mxu0
    %716 = vdwg.mxu0
    %v717 = vld [vmem:[%s5] sm:$0x1f]
    %v719 = vlaneseq
    %v720 = vshrl.u32 %v719, 7
    %v721 = vsub.s32 0, %v720
    %v722 = vrot.slane %v717, %v721
    %v723 = vlaneseq
    %v724 = vshrl.u32 %v723, 7
    %v725 = vsub.s32 1, %v724
    %v726 = vrot.slane %v717, %v725
    %v727 = vlaneseq
    %v728 = vshrl.u32 %v727, 7
    %v729 = vsub.s32 2, %v728
    %v730 = vrot.slane %v717, %v729
    %v731 = vlaneseq
    %v732 = vshrl.u32 %v731, 7
    %v733 = vsub.s32 3, %v732
    %v734 = vrot.slane %v717, %v733
    %v735 = vlaneseq
    %v736 = vshrl.u32 %v735, 7
    %v737 = vsub.s32 4, %v736
    %v738 = vrot.slane %v717, %v737
    %v744 = vadd.f32 %v555, %v722
    %v745 = vadd.f32 %v557, %v726
    %v746 = vadd.f32 %v632, %v730
    %v747 = vadd.f32 %v634, %v734
    %v748 = vadd.f32 %v709, %v738
    %v749 = vadd.f32 %v561, %v722
    %v750 = vadd.f32 %v563, %v726
    %v751 = vadd.f32 %v638, %v730
    %v752 = vadd.f32 %v640, %v734
    %v753 = vadd.f32 %v714, %v738
    %v754 = vtanh.pop %v744
    %v755 = vtanh.pop %v749
    %v756 = vmul.f32 %v754, 0.5
    %v757 = vmul.f32 %v755, 0.5
    %v758 = vadd.f32 %v756, 0.5
    %v759 = vadd.f32 %v757, 0.5
    %v760 = vtanh.pop %v745
    %v761 = vtanh.pop %v750
    %v762 = vmul.f32 %v760, 0.5
    %v763 = vmul.f32 %v761, 0.5
    %v764 = vadd.f32 %v762, 0.5
    %v765 = vadd.f32 %v763, 0.5
    %v766 = vtanh.pop %v746
    %v767 = vtanh.pop %v751
    %v768 = vmul.f32 %v766, 0.5
    %v769 = vmul.f32 %v767, 0.5
    %v770 = vadd.f32 %v768, 0.5
    %v771 = vadd.f32 %v769, 0.5
    %v772 = vtanh.pop %v748
    %v773 = vtanh.pop %v753
    %v774 = vmul.f32 %v772, 0.5
    %v775 = vmul.f32 %v773, 0.5
    %v776 = vadd.f32 %v774, 0.5
    %v777 = vadd.f32 %v775, 0.5
    %v778 = vld [vmem:[#allocation7] sm:$0xff]
    %v779 = vld [vmem:[#allocation7 + $0x8] sm:$0xff]
    %v780 = vmul.f32 %v778, %v764
    %v781 = vmul.f32 %v779, %v765
    %v782 = vld [vmem:[#allocation8] sm:$0xff]
    %v783 = vld [vmem:[#allocation8 + $0x8] sm:$0xff]
    %v784 = vmul.f32 %v782, %v770
    %v785 = vmul.f32 %v783, %v771
    %v786 = vadd.f32 %v780, %v784
    %v787 = vadd.f32 %v781, %v785
    %v788 = vtanh.pop %v747
    %v789 = vtanh.pop %v752
    %v790 = vmul.f32 %v788, %v758
    %v791 = vmul.f32 %v789, %v759
    %v792 = vadd.f32 %v786, %v790
    %v793 = vadd.f32 %v787, %v791
    %v794 = vtanh.pop %v792
    %v795 = vtanh.pop %v793
    %v796 = vmul.f32 %v776, %v794
    %v797 = vmul.f32 %v777, %v795
    %798 = vst [vmem:[#allocation11] sm:$0xff] %v796
    %799 = vst [vmem:[#allocation11 + $0x8] sm:$0xff] %v797
    %800 = vst [vmem:[#allocation12] sm:$0xff] %v792
    %801 = vst [vmem:[#allocation12 + $0x8] sm:$0xff] %v793
    // Predicated region
    $region46: #{tpu_custom_call.1} parent=1 // pred_check
      _
    $region47: #{tpu_custom_call.1} parent=1 // pred_check_branch
      %803 = sbr.rel (0) target = $region49
    $region48: #{tpu_custom_call.1} parent=1 // pred_region
      %s805 = ssub.s32 256, 256
      %806 = vsyncadd [#allocation4], %s805
      %s807 = sshll.u32 [#allocation11], 4
      %s808 = int_to_ptr.vmem [resolvable:$true] %s807
      %813 = dma.vmem_to_hbm [thread:$0]  %s808, 256, %s6, [#allocation4], 128, 128, 8
    $region49: #{tpu_custom_call.1} parent=1 // pred_fallthru
      _
    // Predicated region
    $region50: #{tpu_custom_call.1} parent=1 // pred_check
      _
    $region51: #{tpu_custom_call.1} parent=1 // pred_check_branch
      %815 = sbr.rel (0) target = $region53
    $region52: #{tpu_custom_call.1} parent=1 // pred_region
      %s817 = ssub.s32 256, 256
      %818 = vsyncadd [#allocation13], %s817
      %s819 = sshll.u32 [#allocation12], 4
      %s820 = int_to_ptr.vmem [resolvable:$true] %s819
      %825 = dma.vmem_to_hbm [thread:$0]  %s820, 256, %s7, [#allocation13], 128, 128, 8
    $region53: #{tpu_custom_call.1} parent=1 // pred_fallthru
      _
    // Predicated region
    $region54: #{tpu_custom_call.1} parent=1 // pred_check
      _
    $region55: #{tpu_custom_call.1} parent=1 // pred_check_branch
      %827 = sbr.rel (0) target = $region57
    $region56: #{tpu_custom_call.1} parent=1 // pred_region
      %828 = dma.done [#allocation4], 256
    $region57: #{tpu_custom_call.1} parent=1 // pred_fallthru
      _
    // Predicated region
    $region58: #{tpu_custom_call.1} parent=1 // pred_check
      _
    $region59: #{tpu_custom_call.1} parent=1 // pred_check_branch
      %830 = sbr.rel (0) target = $region61
    $region60: #{tpu_custom_call.1} parent=1 // pred_region
      %831 = dma.done [#allocation13], 256
    $region61: #{tpu_custom_call.1} parent=1 // pred_fallthru
      _
    %832 = vsyncpa [#allocation3], 1
    %833 = vsyncpa [#allocation6], 1
    %834 = vsyncpa [#allocation9], 1
    %835 = vsyncpa [#allocation4], 1
    %836 = vsyncpa [#allocation13], 1

</llo_original>
